<compile_context>
chip_gen: v5e
topology: v5e:2x2
jax: 0.10.0
libtpu: 0.0.40
codegen_flags: <defaults>
</compile_context>

<pallas_src>
import functools

import jax
import jax.numpy as jnp
from jax.experimental import pallas as pl
from jax.experimental.pallas import tpu as pltpu

EPS = 1e-5


def _stats_kernel(x_ref, w_ref, sum_ref, m2_ref, *, inv_s):
    # x_ref: (1, Cin, S)   w_ref: (Cout, Cin)
    # outputs: per-sample partial stats, each (1, Cout, 1)
    x = x_ref[0]                                              # (Cin, S)
    w = w_ref[...]                                            # (Cout, Cin)
    y = jnp.dot(w, x, preferred_element_type=jnp.float32)     # (Cout, S) f32
    s1 = jnp.sum(y, axis=1, keepdims=True)                    # (Cout, 1)
    mu = s1 * inv_s                                           # per-sample mean
    d = y - mu
    m2 = jnp.sum(d * d, axis=1, keepdims=True)                # centered SS
    sum_ref[0] = s1
    m2_ref[0] = m2


def _apply_kernel(x_ref, ws_ref, b_ref, o_ref):
    # x_ref: (1, Cin, S)  ws_ref: (Cout, Cin) = W*scale  b_ref: (Cout, 1)
    # o_ref: (1, Cout, S)  -> out = (W*scale) @ x + bias   (BN folded in)
    x = x_ref[0]
    y = jnp.dot(ws_ref[...], x, preferred_element_type=jnp.float32)
    o_ref[0] = (y + b_ref[...]).astype(o_ref.dtype)


@functools.partial(jax.jit, static_argnames=("stride",))
def shortcut_conv_bn(x_nchw, weight, gamma, beta, *, stride):
    """Non-identity Shortcut path: conv1x1(stride) -> BN (batch stats)."""
    n, cin, h, w_sp = x_nchw.shape
    cout = weight.shape[0]
    f32 = jnp.float32

    # Strided 1x1 conv just picks every stride-th pixel.
    # TODO(synk): the spatial subsample is done by XLA (one pass over x);
    # it could be folded into the kernel with strided/manual DMAs.
    xs = x_nchw[:, :, ::stride, ::stride] if stride != 1 else x_nchw
    ho, wo = xs.shape[2], xs.shape[3]
    s = ho * wo
    x3 = xs.reshape(n, cin, s)                 # contiguous reshape: stays NCHW
    w_mat = weight.reshape(cout, cin)

    # VMEM budget from actual tile sizes (double-buffered), capped at 32 MiB.
    itemsize = jnp.dtype(x_nchw.dtype).itemsize
    est = 2 * (cin * s * itemsize + cout * s * 4) + cout * cin * 4 + (1 << 20)
    vmem_limit = int(min(max(4 * est, 16 << 20), 32 << 20))
    cparams = pltpu.CompilerParams(
        dimension_semantics=("parallel",),      # megacore sharding over N
        vmem_limit_bytes=vmem_limit,
    )

    # ---- Pass 1: per-sample partial BN statistics ------------------------
    psum, pm2 = pl.pallas_call(
        functools.partial(_stats_kernel, inv_s=1.0 / s),
        grid=(n,),
        out_shape=(jax.ShapeDtypeStruct((n, cout, 1), f32),
                   jax.ShapeDtypeStruct((n, cout, 1), f32)),
        in_specs=[
            pl.BlockSpec((1, cin, s), lambda i: (i, 0, 0)),
            pl.BlockSpec((cout, cin), lambda i: (0, 0)),     # W resident
        ],
        out_specs=(
            pl.BlockSpec((1, cout, 1), lambda i: (i, 0, 0)),
            pl.BlockSpec((1, cout, 1), lambda i: (i, 0, 0)),
        ),
        compiler_params=cparams,
    )(x3, w_mat)

    # ---- Tiny finalize (plain JAX): combine stats, fold BN into W --------
    m_total = n * s
    s1 = psum[..., 0]                                   # (N, Cout)
    m2 = pm2[..., 0]                                    # (N, Cout)
    mu_n = s1 / s
    mean = jnp.sum(s1, axis=0) / m_total                # (Cout,)
    # Parallel-variance combine (numerically safe vs E[y^2]-E[y]^2).
    var = (jnp.sum(m2, axis=0)
           + s * jnp.sum((mu_n - mean[None, :]) ** 2, axis=0)) / m_total
    var = jnp.maximum(var, 0.0)
    scale = gamma.astype(f32) * jax.lax.rsqrt(var + EPS)        # (Cout,)
    bias = beta.astype(f32) - mean * scale                      # (Cout,)
    w_scaled = (w_mat.astype(f32) * scale[:, None]).astype(x_nchw.dtype)
    bias_col = bias.reshape(cout, 1)

    # ---- Pass 2: out = (W*scale) @ x + bias, written directly in NCHW ----
    out3 = pl.pallas_call(
        _apply_kernel,
        grid=(n,),
        out_shape=jax.ShapeDtypeStruct((n, cout, s), x_nchw.dtype),
        in_specs=[
            pl.BlockSpec((1, cin, s), lambda i: (i, 0, 0)),
            pl.BlockSpec((cout, cin), lambda i: (0, 0)),     # W*scale resident
            pl.BlockSpec((cout, 1), lambda i: (0, 0)),       # bias resident
        ],
        out_specs=pl.BlockSpec((1, cout, s), lambda i: (i, 0, 0)),
        compiler_params=cparams,
    )(x3, w_scaled, bias_col)

    return out3.reshape(n, cout, ho, wo)        # already NCHW: free reshape


class ShortcutPallas:
    """Mirrors Shortcut(stride, in_planes, expansion, planes)."""

    def __init__(self, stride, in_planes, expansion, planes, key):
        self.stride = stride
        self.identity = not (stride != 1 or in_planes != expansion * planes)
        if not self.identity:
            cout = expansion * planes
            (k_w,) = jax.random.split(key, 1)
            # Conv weight matches nn.Conv2d(in_planes, cout, 1, stride, bias=False).
            fan_in = in_planes
            self.weight = (jax.random.normal(k_w, (cout, in_planes, 1, 1),
                                             dtype=jnp.float32)
                           * (2.0 / fan_in) ** 0.5)
            # 5 task-specific BatchNorm2d affine params (non-trivial values so
            # the BN path is actually exercised).
            self.gammas = jnp.stack(
                [jnp.linspace(0.5 + 0.1 * t, 1.5 + 0.1 * t, cout,
                              dtype=jnp.float32) for t in range(5)])
            self.betas = jnp.stack(
                [jnp.linspace(-0.2 * t, 0.2 * t, cout, dtype=jnp.float32)
                 for t in range(5)])

    def __call__(self, x, t, p=None, epoch=None):
        if self.identity:
            return x  # Sequential() with no modules == identity
        return shortcut_conv_bn(x, self.weight, self.gammas[t], self.betas[t],
                                stride=self.stride)


def _reference(x, weight, gamma, beta, stride):
    # Pure-JAX reference for sanity check.
    xs = x[:, :, ::stride, ::stride] if stride != 1 else x
    y = jnp.einsum("nchw,oc->nohw", xs, weight.reshape(weight.shape[0], -1))
    mean = jnp.mean(y, axis=(0, 2, 3), keepdims=True)
    var = jnp.mean((y - mean) ** 2, axis=(0, 2, 3), keepdims=True)
    g = gamma.reshape(1, -1, 1, 1)
    b = beta.reshape(1, -1, 1, 1)
    return (y - mean) / jnp.sqrt(var + EPS) * g + b


if __name__ == "__main__":
    key = jax.random.PRNGKey(0)
    k_x, k_m, k_x2, k_m2 = jax.random.split(key, 4)

    # Projection-shortcut path: stride=2, in_planes=4, expansion=1, planes=8.
    N, C, H, W = 2, 4, 16, 16
    stride, in_planes, expansion, planes = 2, 4, 1, 8
    t = 1  # task index selects bn1[t]

    x = jax.random.normal(k_x, (N, C, H, W), dtype=jnp.float32)
    module = ShortcutPallas(stride, in_planes, expansion, planes, k_m)
    out = jax.block_until_ready(module(x, t, p=None, epoch=0))
    ref = _reference(x, module.weight, module.gammas[t], module.betas[t],
                     stride)
    assert out.shape == (N, expansion * planes, H // stride, W // stride)
    assert jnp.allclose(out, ref, atol=1e-4, rtol=1e-3), \
        float(jnp.max(jnp.abs(out - ref)))

    # Second check: channel counts divisible by 8 (realistic small block).
    x2 = jax.random.normal(k_x2, (2, 16, 16, 16), dtype=jnp.float32)
    module2 = ShortcutPallas(2, 16, 2, 16, k_m2)   # conv 16 -> 32, stride 2
    out2 = jax.block_until_ready(module2(x2, 0, p=None, epoch=0))
    ref2 = _reference(x2, module2.weight, module2.gammas[0], module2.betas[0],
                      2)
    assert out2.shape == (2, 32, 8, 8)
    assert jnp.allclose(out2, ref2, atol=1e-4, rtol=1e-3), \
        float(jnp.max(jnp.abs(out2 - ref2)))

    # Identity path (stride=1, in_planes == expansion*planes): passthrough.
    ident = ShortcutPallas(1, 4, 1, 4, k_m)
    assert ident.identity
    assert jnp.array_equal(ident(x, t, p=None, epoch=0), x)

    print("KERNEL_OK")
</pallas_src>

<mosaic_0001>
module attributes {stable_mosaic.version = 11 : i64} {
  func.func @_stats_kernel(%arg0: i32, %arg1: memref<1x4x64xf32, #tpu.memory_space<vmem>>, %arg2: memref<8x4xf32, #tpu.memory_space<vmem>>, %arg3: memref<1x8x1xf32, #tpu.memory_space<vmem>>, %arg4: memref<1x8x1xf32, #tpu.memory_space<vmem>>) attributes {dimension_semantics = [#tpu.dimension_semantics<parallel>], iteration_bounds = array<i64: 2>, scalar_prefetch = 0 : i64, scratch_operands = 0 : i64, tpu.core_type = #tpu.core_type<tc>, window_params = [{transform_indices = @transform_0, window_bounds = array<i64: 1, 4, 64>}, {pipeline_mode = #tpu.pipeline_mode<synchronous>, transform_indices = @transform_1, window_bounds = array<i64: 8, 4>}, {transform_indices = @transform_2, window_bounds = array<i64: 1, 8, 1>}, {transform_indices = @transform_3, window_bounds = array<i64: 1, 8, 1>}]} {
    %c0 = arith.constant 0 : index
    %c0_0 = arith.constant 0 : index
    %c0_1 = arith.constant 0 : index
    %0 = vector.load %arg1[%c0, %c0_0, %c0_1] : memref<1x4x64xf32, #tpu.memory_space<vmem>>, vector<1x4x64xf32>
    %1 = vector.shape_cast %0 : vector<1x4x64xf32> to vector<4x64xf32>
    %c0_2 = arith.constant 0 : index
    %c0_3 = arith.constant 0 : index
    %2 = vector.load %arg2[%c0_2, %c0_3] : memref<8x4xf32, #tpu.memory_space<vmem>>, vector<8x4xf32>
    %cst = arith.constant dense<0.000000e+00> : vector<8x64xf32>
    %3 = tpu.matmul %2, %1, %cst {dimension_numbers = #tpu.dot_dimension_numbers<[1], [0], [0], [1], [0, 0, 1, 1], [], []>} : vector<8x4xf32>, vector<4x64xf32>, vector<8x64xf32> -> vector<8x64xf32>
    %cst_4 = arith.constant dense<0.000000e+00> : vector<8xf32>
    %4 = vector.multi_reduction <add>, %3, %cst_4 [1] : vector<8x64xf32> to vector<8xf32>
    %5 = vector.shape_cast %4 : vector<8xf32> to vector<8x1xf32>
    %cst_5 = arith.constant 1.562500e-02 : f32
    %6 = vector.broadcast %cst_5 : f32 to vector<8x1xf32>
    %7 = arith.mulf %5, %6 : vector<8x1xf32>
    %8 = vector.broadcast %7 : vector<8x1xf32> to vector<8x64xf32>
    %9 = arith.subf %3, %8 : vector<8x64xf32>
    %10 = arith.mulf %9, %9 : vector<8x64xf32>
    %cst_6 = arith.constant dense<0.000000e+00> : vector<8xf32>
    %11 = vector.multi_reduction <add>, %10, %cst_6 [1] : vector<8x64xf32> to vector<8xf32>
    %12 = vector.shape_cast %11 : vector<8xf32> to vector<8x1xf32>
    %c0_7 = arith.constant 0 : index
    %c0_8 = arith.constant 0 : index
    %c0_9 = arith.constant 0 : index
    %13 = vector.load %arg3[%c0_7, %c0_8, %c0_9] : memref<1x8x1xf32, #tpu.memory_space<vmem>>, vector<1x8x1xf32>
    %14 = vector.shape_cast %13 : vector<1x8x1xf32> to vector<8x1xf32>
    %15 = vector.shape_cast %5 : vector<8x1xf32> to vector<1x8x1xf32>
    tpu.vector_store %arg3[%c0_7, %c0_8, %c0_9], %15 {strides = array<i32>} : memref<1x8x1xf32, #tpu.memory_space<vmem>>, vector<1x8x1xf32>,
    %c0_10 = arith.constant 0 : index
    %c0_11 = arith.constant 0 : index
    %c0_12 = arith.constant 0 : index
    %16 = vector.load %arg4[%c0_10, %c0_11, %c0_12] : memref<1x8x1xf32, #tpu.memory_space<vmem>>, vector<1x8x1xf32>
    %17 = vector.shape_cast %16 : vector<1x8x1xf32> to vector<8x1xf32>
    %18 = vector.shape_cast %12 : vector<8x1xf32> to vector<1x8x1xf32>
    tpu.vector_store %arg4[%c0_10, %c0_11, %c0_12], %18 {strides = array<i32>} : memref<1x8x1xf32, #tpu.memory_space<vmem>>, vector<1x8x1xf32>,
    return
  }
  func.func @transform_0(%arg0: i32) -> (i32, i32, i32) {
    %c0_i32 = arith.constant 0 : i32
    %c0_i32_0 = arith.constant 0 : i32
    %c0_i32_1 = arith.constant 0 : i32
    return %arg0, %c0_i32, %c0_i32_0 : i32, i32, i32
  }
  func.func @transform_1(%arg0: i32) -> (i32, i32) {
    %c0_i32 = arith.constant 0 : i32
    %c0_i32_0 = arith.constant 0 : i32
    %c0_i32_1 = arith.constant 0 : i32
    return %c0_i32, %c0_i32_0 : i32, i32
  }
  func.func @transform_2(%arg0: i32) -> (i32, i32, i32) {
    %c0_i32 = arith.constant 0 : i32
    %c0_i32_0 = arith.constant 0 : i32
    %c0_i32_1 = arith.constant 0 : i32
    return %arg0, %c0_i32, %c0_i32_0 : i32, i32, i32
  }
  func.func @transform_3(%arg0: i32) -> (i32, i32, i32) {
    %c0_i32 = arith.constant 0 : i32
    %c0_i32_0 = arith.constant 0 : i32
    %c0_i32_1 = arith.constant 0 : i32
    return %arg0, %c0_i32, %c0_i32_0 : i32, i32, i32
  }
}

module attributes {stable_mosaic.version = 11 : i64} {
  func.func @_apply_kernel(%arg0: i32, %arg1: memref<1x4x64xf32, #tpu.memory_space<vmem>>, %arg2: memref<8x4xf32, #tpu.memory_space<vmem>>, %arg3: memref<8x1xf32, #tpu.memory_space<vmem>>, %arg4: memref<1x8x64xf32, #tpu.memory_space<vmem>>) attributes {dimension_semantics = [#tpu.dimension_semantics<parallel>], iteration_bounds = array<i64: 2>, scalar_prefetch = 0 : i64, scratch_operands = 0 : i64, tpu.core_type = #tpu.core_type<tc>, window_params = [{transform_indices = @transform_0, window_bounds = array<i64: 1, 4, 64>}, {pipeline_mode = #tpu.pipeline_mode<synchronous>, transform_indices = @transform_1, window_bounds = array<i64: 8, 4>}, {pipeline_mode = #tpu.pipeline_mode<synchronous>, transform_indices = @transform_2, window_bounds = array<i64: 8, 1>}, {transform_indices = @transform_3, window_bounds = array<i64: 1, 8, 64>}]} {
    %c0 = arith.constant 0 : index
    %c0_0 = arith.constant 0 : index
    %c0_1 = arith.constant 0 : index
    %0 = vector.load %arg1[%c0, %c0_0, %c0_1] : memref<1x4x64xf32, #tpu.memory_space<vmem>>, vector<1x4x64xf32>
    %1 = vector.shape_cast %0 : vector<1x4x64xf32> to vector<4x64xf32>
    %c0_2 = arith.constant 0 : index
    %c0_3 = arith.constant 0 : index
    %2 = vector.load %arg2[%c0_2, %c0_3] : memref<8x4xf32, #tpu.memory_space<vmem>>, vector<8x4xf32>
    %cst = arith.constant dense<0.000000e+00> : vector<8x64xf32>
    %3 = tpu.matmul %2, %1, %cst {dimension_numbers = #tpu.dot_dimension_numbers<[1], [0], [0], [1], [0, 0, 1, 1], [], []>} : vector<8x4xf32>, vector<4x64xf32>, vector<8x64xf32> -> vector<8x64xf32>
    %c0_4 = arith.constant 0 : index
    %c0_5 = arith.constant 0 : index
    %4 = vector.load %arg3[%c0_4, %c0_5] : memref<8x1xf32, #tpu.memory_space<vmem>>, vector<8x1xf32>
    %5 = vector.broadcast %4 : vector<8x1xf32> to vector<8x64xf32>
    %6 = arith.addf %3, %5 : vector<8x64xf32>
    %c0_6 = arith.constant 0 : index
    %c0_7 = arith.constant 0 : index
    %c0_8 = arith.constant 0 : index
    %7 = vector.load %arg4[%c0_6, %c0_7, %c0_8] : memref<1x8x64xf32, #tpu.memory_space<vmem>>, vector<1x8x64xf32>
    %8 = vector.shape_cast %7 : vector<1x8x64xf32> to vector<8x64xf32>
    %9 = vector.shape_cast %6 : vector<8x64xf32> to vector<1x8x64xf32>
    tpu.vector_store %arg4[%c0_6, %c0_7, %c0_8], %9 {strides = array<i32>} : memref<1x8x64xf32, #tpu.memory_space<vmem>>, vector<1x8x64xf32>,
    return
  }
  func.func @transform_0(%arg0: i32) -> (i32, i32, i32) {
    %c0_i32 = arith.constant 0 : i32
    %c0_i32_0 = arith.constant 0 : i32
    %c0_i32_1 = arith.constant 0 : i32
    return %arg0, %c0_i32, %c0_i32_0 : i32, i32, i32
  }
  func.func @transform_1(%arg0: i32) -> (i32, i32) {
    %c0_i32 = arith.constant 0 : i32
    %c0_i32_0 = arith.constant 0 : i32
    %c0_i32_1 = arith.constant 0 : i32
    return %c0_i32, %c0_i32_0 : i32, i32
  }
  func.func @transform_2(%arg0: i32) -> (i32, i32) {
    %c0_i32 = arith.constant 0 : i32
    %c0_i32_0 = arith.constant 0 : i32
    %c0_i32_1 = arith.constant 0 : i32
    return %c0_i32, %c0_i32_0 : i32, i32
  }
  func.func @transform_3(%arg0: i32) -> (i32, i32, i32) {
    %c0_i32 = arith.constant 0 : i32
    %c0_i32_0 = arith.constant 0 : i32
    %c0_i32_1 = arith.constant 0 : i32
    return %arg0, %c0_i32, %c0_i32_0 : i32, i32, i32
  }
}

</mosaic_0001>

<llo_original>
// kernel: shortcut_conv_bn.2
$region0: #{shortcut_conv_bn.2}
  #allocation0 [shape = 'u32[]', space=smem, size = 0x4, offset = 0x4, fixed_abs, tag = 'smem constant byte address 0x4 - core index']
  #allocation1 [shape = 'u32[72,128]{1,0:T(1,128)}', space=vmem, size = 0x9000, scoped, tag = 'internal scratch']
  %s0 = inlined_call_operand.vmem [shape: f32[2,4,64], index: 0, kind: input, shape index: {}]
  %s1 = inlined_call_operand.vmem [shape: f32[8,4], index: 1, kind: input, shape index: {}]
  %s2 = inlined_call_operand.vmem [shape: f32[2,8,1], index: 2, kind: output, shape index: {0}]
  %s3 = inlined_call_operand.vmem [shape: f32[2,8,1], index: 3, kind: output, shape index: {1}]
  %4 = xla_tuple %s2, %s3
  %s5 = sld [smem:[#allocation0]]
  $region49: #{shortcut_conv_bn.2} parent=0
    _
  %s7 = ssub.s32 1, %s5
  %s8 = scalar_select 0, %s7, %s5
  loop: start=0, step=1, limit=4
  $region2: #{shortcut_conv_bn.2} parent=0 // loop_pre_header
    _
  $region3: #{shortcut_conv_bn.2} parent=0 // loop_header
    %s10 = sphi 0, %s14
    %p11 = scmp.ge.s32.totalorder %s10, 4
    %s20 = sphi 0, %s22
    %s23 = sphi 0, %s20
    %s24 = sphi 0, %s23
    %s40 = sphi 0, %s24
    %s44 = sphi 0, %s44
    %s46 = sphi 0, %s44
    %s47 = sphi 0, %s46
    %s61 = sphi 0, %s47
    %s67 = sphi 0, %s69
    %s70 = sphi 0, %s67
    %s71 = sphi 0, %s70
    %s87 = sphi 0, %s71
    %s93 = sphi 0, %s95
    %s96 = sphi 0, %s93
    %s97 = sphi 0, %s96
    %s113 = sphi 0, %s97
  $region4: #{shortcut_conv_bn.2} parent=0 // loop_header_branch
    %13 = sbr.rel (%p11) target = $region8
  $region5: #{shortcut_conv_bn.2} parent=0 // loop_body
    %s15 = ssub.s32 %s10, 1
    %s16 = ssub.s32 %s10, 2
    %s17 = sadd.s32 %s10, 1
    %s18 = ssub.s32 %s10, %s17
    %p19 = scmp.eq.s32.totalorder %s18, 0
    %s21 = sadd.s32 %s20, 1
    %s22 = scalar_select %p19, %s20, %s21
    %p25 = pneg %p19
    %p26 = scmp.eq.s32.totalorder %s10, 1
    %p27 = por %p25, %p26
    %p28 = scmp.ne.s32.totalorder %s20, %s23
    %p29 = scmp.eq.s32.totalorder %s10, 0
    %p30 = por %p28, %p29
    %p31 = scmp.ne.s32.totalorder %s20, %s23
    %p32 = scmp.eq.s32.totalorder %s15, 1
    %p33 = por %p31, %p32
    %p34 = scmp.ne.s32.totalorder %s23, %s24
    %p35 = scmp.eq.s32.totalorder %s15, 0
    %p36 = por %p34, %p35
    %p37 = scmp.ne.s32.totalorder %s23, %s24
    %p38 = scmp.eq.s32.totalorder %s16, 1
    %p39 = por %p37, %p38
    %p41 = scmp.ne.s32.totalorder %s24, %s40
    %p42 = scmp.eq.s32.totalorder %s16, 0
    %p43 = por %p41, %p42
    %s45 = sadd.s32 %s44, 1
    %p48 = scmp.eq.s32.totalorder %s10, 1
    %p49 = scmp.ne.s32.totalorder %s44, %s46
    %p50 = scmp.eq.s32.totalorder %s10, 0
    %p51 = por %p49, %p50
    %p52 = scmp.ne.s32.totalorder %s44, %s46
    %p53 = scmp.eq.s32.totalorder %s15, 1
    %p54 = por %p52, %p53
    %p55 = scmp.ne.s32.totalorder %s46, %s47
    %p56 = scmp.eq.s32.totalorder %s15, 0
    %p57 = por %p55, %p56
    %p58 = scmp.ne.s32.totalorder %s46, %s47
    %p59 = scmp.eq.s32.totalorder %s16, 1
    %p60 = por %p58, %p59
    %p62 = scmp.ne.s32.totalorder %s47, %s61
    %p63 = scmp.eq.s32.totalorder %s16, 0
    %p64 = por %p62, %p63
    %s65 = ssub.s32 %s10, %s17
    %p66 = scmp.eq.s32.totalorder %s65, 0
    %s68 = sadd.s32 %s67, 1
    %s69 = scalar_select %p66, %s67, %s68
    %p72 = pneg %p66
    %p73 = scmp.eq.s32.totalorder %s10, 1
    %p74 = por %p72, %p73
    %p75 = scmp.ne.s32.totalorder %s67, %s70
    %p76 = scmp.eq.s32.totalorder %s10, 0
    %p77 = por %p75, %p76
    %p78 = scmp.ne.s32.totalorder %s67, %s70
    %p79 = scmp.eq.s32.totalorder %s15, 1
    %p80 = por %p78, %p79
    %p81 = scmp.ne.s32.totalorder %s70, %s71
    %p82 = scmp.eq.s32.totalorder %s15, 0
    %p83 = por %p81, %p82
    %p84 = scmp.ne.s32.totalorder %s70, %s71
    %p85 = scmp.eq.s32.totalorder %s16, 1
    %p86 = por %p84, %p85
    %p88 = scmp.ne.s32.totalorder %s71, %s87
    %p89 = scmp.eq.s32.totalorder %s16, 0
    %p90 = por %p88, %p89
    %s91 = ssub.s32 %s10, %s17
    %p92 = scmp.eq.s32.totalorder %s91, 0
    %s94 = sadd.s32 %s93, 1
    %s95 = scalar_select %p92, %s93, %s94
    %p98 = pneg %p92
    %p99 = scmp.eq.s32.totalorder %s10, 1
    %p100 = por %p98, %p99
    %p101 = scmp.ne.s32.totalorder %s93, %s96
    %p102 = scmp.eq.s32.totalorder %s10, 0
    %p103 = por %p101, %p102
    %p104 = scmp.ne.s32.totalorder %s93, %s96
    %p105 = scmp.eq.s32.totalorder %s15, 1
    %p106 = por %p104, %p105
    %p107 = scmp.ne.s32.totalorder %s96, %s97
    %p108 = scmp.eq.s32.totalorder %s15, 0
    %p109 = por %p107, %p108
    %p110 = scmp.ne.s32.totalorder %s96, %s97
    %p111 = scmp.eq.s32.totalorder %s16, 1
    %p112 = por %p110, %p111
    %p114 = scmp.ne.s32.totalorder %s97, %s113
    %p115 = scmp.eq.s32.totalorder %s16, 0
    %p116 = por %p114, %p115
    %p117 = scmp.le.s32.totalorder 1, %s10
    %p118 = scmp.lt.s32.totalorder %s10, 3
    %p119 = pnand %p117, %p118
    %p120 = pneg %p119
    // Predicated region
    $region9: #{shortcut_conv_bn.2} parent=5 // pred_check
      _
    $region10: #{shortcut_conv_bn.2} parent=5 // pred_check_branch
      %122 = sbr.rel (%p119) target = $region12
    $region11: #{shortcut_conv_bn.2} parent=5 // pred_region
      %s123 = ssub.s32 %s10, 1
      // Predicated region
      $region13: #{shortcut_conv_bn.2} parent=11 // pred_check
        %p124 = pneg %p57
      $region14: #{shortcut_conv_bn.2} parent=11 // pred_check_branch
        %126 = sbr.rel (%p124) target = $region16
      $region15: #{shortcut_conv_bn.2} parent=11 // pred_region
        _
      $region16: #{shortcut_conv_bn.2} parent=11 // pred_fallthru
        _
    $region12: #{shortcut_conv_bn.2} parent=5 // pred_fallthru
      _
    %p127 = scmp.lt.s32.totalorder %s10, 2
    // Predicated region
    $region17: #{shortcut_conv_bn.2} parent=5 // pred_check
      %p128 = pneg %p127
    $region18: #{shortcut_conv_bn.2} parent=5 // pred_check_branch
      %130 = sbr.rel (%p128) target = $region20
    $region19: #{shortcut_conv_bn.2} parent=5 // pred_region
      // Predicated region
      $region21: #{shortcut_conv_bn.2} parent=19 // pred_check
        %p131 = pneg %p30
      $region22: #{shortcut_conv_bn.2} parent=19 // pred_check_branch
        %133 = sbr.rel (%p131) target = $region24
      $region23: #{shortcut_conv_bn.2} parent=19 // pred_region
        %p134 = scmp.lt.s32.totalorder %s10, 1
        %s135 = scalar_select %p134, %s10, 1
        %s136 = smul.addr %s135, 4
        %s137 = scalar_lea.vmem %s0, %s136
      $region24: #{shortcut_conv_bn.2} parent=19 // pred_fallthru
        _
    $region20: #{shortcut_conv_bn.2} parent=5 // pred_fallthru
      _
    %p138 = scmp.le.s32.totalorder 1, %s10
    %p139 = scmp.lt.s32.totalorder %s10, 3
    %p140 = pnand %p138, %p139
    %p141 = pneg %p140
    // Predicated region
    $region25: #{shortcut_conv_bn.2} parent=5 // pred_check
      _
    $region26: #{shortcut_conv_bn.2} parent=5 // pred_check_branch
      %143 = sbr.rel (%p140) target = $region28
    $region27: #{shortcut_conv_bn.2} parent=5 // pred_region
      %s144 = ssub.s32 %s10, 1
      %p145 = scmp.lt.s32.totalorder %s15, 1
      %s146 = scalar_select %p145, %s15, 1
      %s147 = smul.addr %s146, 4
      %s148 = scalar_lea.vmem %s0, %s147
      %p149 = pneg %p36
      %p150 = pneg %p33
      %p151 = pneg %p57
      %p152 = pneg %p54
      %p153 = pneg %p83
      %p154 = pneg %p80
      %p155 = scmp.lt.s32.totalorder %s15, 1
      %s156 = scalar_select %p155, %s15, 1
      %s157 = smul.addr %s156, 8
      %s158 = scalar_lea.vmem %s2, %s157
      %p159 = pneg %p109
      %p160 = pneg %p106
      %p161 = scmp.lt.s32.totalorder %s15, 1
      %s162 = scalar_select %p161, %s15, 1
      %s163 = smul.addr %s162, 8
      %s164 = scalar_lea.vmem %s3, %s163
      %p165 = scmp.lt.s32.totalorder %s15, 1
      %s166 = scalar_select %p165, %s15, 1
      %s167 = smul.addr %s166, 4
      %s168 = scalar_lea.vmem %s0, %s167
      %p169 = scmp.lt.s32.totalorder %s15, 1
      %s170 = scalar_select %p169, %s15, 1
      %s171 = smul.addr %s170, 8
      %s172 = scalar_lea.vmem %s2, %s171
      %p173 = scmp.lt.s32.totalorder %s15, 1
      %s174 = scalar_select %p173, %s15, 1
      %s175 = smul.addr %s174, 8
      %s176 = scalar_lea.vmem %s3, %s175
      %v177 = vld [vmem:[%s168] sm:$0xf]
      %v178 = vld [vmem:[%s1] sm:$0xff]
      %vm179 = vcmask 31744
      %v181 = vsel %vm179, %v178, 0
      %vm183 = vcmask 1043456
      %v185 = vsel %vm183, %v177, 0
      %187 = vmatpush.msra.mxu0 0.0
      %188 = vmatpush.msra.mxu0 0.0
      %189 = vmatpush.msra.mxu0 0.0
      %190 = vmatpush.msra.mxu0 0.0
      %191 = vmatpush.msra.mxu0 0.0
      %192 = vmatpush.msra.mxu0 0.0
      %193 = vmatpush.msra.mxu0 0.0
      %194 = vmatpush.msra.mxu0 0.0
      %195 = vmatpush.msra.mxu0 0.0
      %196 = vmatpush.msra.mxu0 0.0
      %197 = vmatpush.msra.mxu0 0.0
      %198 = vmatpush.msra.mxu0 0.0
      %199 = vmatpush.msra.mxu0 0.0
      %200 = vmatpush.msra.mxu0 0.0
      %201 = vmatpush.msra.mxu0 0.0
      %202 = vmatpush.msra.mxu0 %v185
      %203 = vmatmul.f32.gmra.mxu0 %v181
      %v204 = vpop.f32.mrf.mxu0
      %v205 = vadd.f32 0.0, %v204
      %206 = vdwg.mxu0
      %vm207 = vcmask 523264
      %v208 = vsel %vm207, %v205, 0.0
      %209 = vadd.xlane.f32.xlu0 %v208
      %v210 = vpop.xlane.xlu0 %209
      %v211 = vmul.f32 %v210, 0.015625
      %v212 = vsub.f32 %v205, %v211
      %v213 = vmul.f32 %v212, %v212
      %v214 = vsel %vm207, %v213, 0.0
      %215 = vadd.xlane.f32.xlu0 %v214
      %v216 = vpop.xlane.xlu0 %215
      %vm217 = vcmask 7168
      %218 = vst.msk [vmem:[%s172] sm:$0xff] %vm217, %v210
      %219 = vst.msk [vmem:[%s176] sm:$0xff] %vm217, %v216
      %p220 = scmp.lt.s32.totalorder %s15, 1
      %s221 = scalar_select %p220, %s15, 1
      %s222 = smul.addr %s221, 8
      %s223 = scalar_lea.vmem %s2, %s222
      %p224 = scmp.lt.s32.totalorder %s15, 1
      %s225 = scalar_select %p224, %s15, 1
      %s226 = smul.addr %s225, 8
      %s227 = scalar_lea.vmem %s3, %s226
      // Predicated region
      $region29: #{shortcut_conv_bn.2} parent=27 // pred_check
        %p228 = pneg %p80
      $region30: #{shortcut_conv_bn.2} parent=27 // pred_check_branch
        %230 = sbr.rel (%p228) target = $region32
      $region31: #{shortcut_conv_bn.2} parent=27 // pred_region
        _
      $region32: #{shortcut_conv_bn.2} parent=27 // pred_fallthru
        _
      // Predicated region
      $region33: #{shortcut_conv_bn.2} parent=27 // pred_check
        %p231 = pneg %p106
      $region34: #{shortcut_conv_bn.2} parent=27 // pred_check_branch
        %233 = sbr.rel (%p231) target = $region36
      $region35: #{shortcut_conv_bn.2} parent=27 // pred_region
        _
      $region36: #{shortcut_conv_bn.2} parent=27 // pred_fallthru
        _
    $region28: #{shortcut_conv_bn.2} parent=5 // pred_fallthru
      _
    %p234 = scmp.le.s32.totalorder 2, %s10
    // Predicated region
    $region37: #{shortcut_conv_bn.2} parent=5 // pred_check
      %p235 = pneg %p234
    $region38: #{shortcut_conv_bn.2} parent=5 // pred_check_branch
      %237 = sbr.rel (%p235) target = $region40
    $region39: #{shortcut_conv_bn.2} parent=5 // pred_region
      %s238 = ssub.s32 %s10, 2
      // Predicated region
      $region41: #{shortcut_conv_bn.2} parent=39 // pred_check
        %p239 = pneg %p86
      $region42: #{shortcut_conv_bn.2} parent=39 // pred_check_branch
        %241 = sbr.rel (%p239) target = $region44
      $region43: #{shortcut_conv_bn.2} parent=39 // pred_region
        %p242 = scmp.lt.s32.totalorder %s16, 1
        %s243 = scalar_select %p242, %s16, 1
        %s244 = smul.addr %s243, 8
        %s245 = scalar_lea.vmem %s2, %s244
      $region44: #{shortcut_conv_bn.2} parent=39 // pred_fallthru
        _
      // Predicated region
      $region45: #{shortcut_conv_bn.2} parent=39 // pred_check
        %p246 = pneg %p112
      $region46: #{shortcut_conv_bn.2} parent=39 // pred_check_branch
        %248 = sbr.rel (%p246) target = $region48
      $region47: #{shortcut_conv_bn.2} parent=39 // pred_region
        %p249 = scmp.lt.s32.totalorder %s16, 1
        %s250 = scalar_select %p249, %s16, 1
        %s251 = smul.addr %s250, 8
        %s252 = scalar_lea.vmem %s3, %s251
      $region48: #{shortcut_conv_bn.2} parent=39 // pred_fallthru
        _
    $region40: #{shortcut_conv_bn.2} parent=5 // pred_fallthru
      _
  $region6: #{shortcut_conv_bn.2} parent=0 // loop_footer
    %s14 = sadd.s32 1, %s10
  $region7: #{shortcut_conv_bn.2} parent=0 // loop_footer_branch
    %9 = sbr.rel target = $region3
  $region8: #{shortcut_conv_bn.2} parent=0 // loop_exit
    _

// kernel: shortcut_conv_bn.3
$region0: #{shortcut_conv_bn.3}
  #allocation0 [shape = 'u32[]', space=smem, size = 0x4, offset = 0x4, fixed_abs, tag = 'smem constant byte address 0x4 - core index']
  #allocation1 [shape = 'u32[72,128]{1,0:T(1,128)}', space=vmem, size = 0x9000, scoped, tag = 'internal scratch']
  %s0 = inlined_call_operand.vmem [shape: f32[2,4,64], index: 0, kind: input, shape index: {}]
  %s1 = inlined_call_operand.vmem [shape: f32[8,4], index: 1, kind: input, shape index: {}]
  %s2 = inlined_call_operand.vmem [shape: f32[8,1], index: 2, kind: input, shape index: {}]
  %s3 = inlined_call_operand.vmem [shape: f32[2,8,64], index: 3, kind: output, shape index: {}]
  %s4 = sld [smem:[#allocation0]]
  $region45: #{shortcut_conv_bn.3} parent=0
    _
  %s6 = ssub.s32 1, %s4
  %s7 = scalar_select 0, %s6, %s4
  loop: start=0, step=1, limit=4
  $region2: #{shortcut_conv_bn.3} parent=0 // loop_pre_header
    _
  $region3: #{shortcut_conv_bn.3} parent=0 // loop_header
    %s9 = sphi 0, %s13
    %p10 = scmp.ge.s32.totalorder %s9, 4
    %s19 = sphi 0, %s21
    %s22 = sphi 0, %s19
    %s23 = sphi 0, %s22
    %s39 = sphi 0, %s23
    %s43 = sphi 0, %s43
    %s45 = sphi 0, %s43
    %s46 = sphi 0, %s45
    %s60 = sphi 0, %s46
    %s64 = sphi 0, %s64
    %s66 = sphi 0, %s64
    %s67 = sphi 0, %s66
    %s81 = sphi 0, %s67
    %s87 = sphi 0, %s89
    %s90 = sphi 0, %s87
    %s91 = sphi 0, %s90
    %s107 = sphi 0, %s91
  $region4: #{shortcut_conv_bn.3} parent=0 // loop_header_branch
    %12 = sbr.rel (%p10) target = $region8
  $region5: #{shortcut_conv_bn.3} parent=0 // loop_body
    %s14 = ssub.s32 %s9, 1
    %s15 = ssub.s32 %s9, 2
    %s16 = sadd.s32 %s9, 1
    %s17 = ssub.s32 %s9, %s16
    %p18 = scmp.eq.s32.totalorder %s17, 0
    %s20 = sadd.s32 %s19, 1
    %s21 = scalar_select %p18, %s19, %s20
    %p24 = pneg %p18
    %p25 = scmp.eq.s32.totalorder %s9, 1
    %p26 = por %p24, %p25
    %p27 = scmp.ne.s32.totalorder %s19, %s22
    %p28 = scmp.eq.s32.totalorder %s9, 0
    %p29 = por %p27, %p28
    %p30 = scmp.ne.s32.totalorder %s19, %s22
    %p31 = scmp.eq.s32.totalorder %s14, 1
    %p32 = por %p30, %p31
    %p33 = scmp.ne.s32.totalorder %s22, %s23
    %p34 = scmp.eq.s32.totalorder %s14, 0
    %p35 = por %p33, %p34
    %p36 = scmp.ne.s32.totalorder %s22, %s23
    %p37 = scmp.eq.s32.totalorder %s15, 1
    %p38 = por %p36, %p37
    %p40 = scmp.ne.s32.totalorder %s23, %s39
    %p41 = scmp.eq.s32.totalorder %s15, 0
    %p42 = por %p40, %p41
    %s44 = sadd.s32 %s43, 1
    %p47 = scmp.eq.s32.totalorder %s9, 1
    %p48 = scmp.ne.s32.totalorder %s43, %s45
    %p49 = scmp.eq.s32.totalorder %s9, 0
    %p50 = por %p48, %p49
    %p51 = scmp.ne.s32.totalorder %s43, %s45
    %p52 = scmp.eq.s32.totalorder %s14, 1
    %p53 = por %p51, %p52
    %p54 = scmp.ne.s32.totalorder %s45, %s46
    %p55 = scmp.eq.s32.totalorder %s14, 0
    %p56 = por %p54, %p55
    %p57 = scmp.ne.s32.totalorder %s45, %s46
    %p58 = scmp.eq.s32.totalorder %s15, 1
    %p59 = por %p57, %p58
    %p61 = scmp.ne.s32.totalorder %s46, %s60
    %p62 = scmp.eq.s32.totalorder %s15, 0
    %p63 = por %p61, %p62
    %s65 = sadd.s32 %s64, 1
    %p68 = scmp.eq.s32.totalorder %s9, 1
    %p69 = scmp.ne.s32.totalorder %s64, %s66
    %p70 = scmp.eq.s32.totalorder %s9, 0
    %p71 = por %p69, %p70
    %p72 = scmp.ne.s32.totalorder %s64, %s66
    %p73 = scmp.eq.s32.totalorder %s14, 1
    %p74 = por %p72, %p73
    %p75 = scmp.ne.s32.totalorder %s66, %s67
    %p76 = scmp.eq.s32.totalorder %s14, 0
    %p77 = por %p75, %p76
    %p78 = scmp.ne.s32.totalorder %s66, %s67
    %p79 = scmp.eq.s32.totalorder %s15, 1
    %p80 = por %p78, %p79
    %p82 = scmp.ne.s32.totalorder %s67, %s81
    %p83 = scmp.eq.s32.totalorder %s15, 0
    %p84 = por %p82, %p83
    %s85 = ssub.s32 %s9, %s16
    %p86 = scmp.eq.s32.totalorder %s85, 0
    %s88 = sadd.s32 %s87, 1
    %s89 = scalar_select %p86, %s87, %s88
    %p92 = pneg %p86
    %p93 = scmp.eq.s32.totalorder %s9, 1
    %p94 = por %p92, %p93
    %p95 = scmp.ne.s32.totalorder %s87, %s90
    %p96 = scmp.eq.s32.totalorder %s9, 0
    %p97 = por %p95, %p96
    %p98 = scmp.ne.s32.totalorder %s87, %s90
    %p99 = scmp.eq.s32.totalorder %s14, 1
    %p100 = por %p98, %p99
    %p101 = scmp.ne.s32.totalorder %s90, %s91
    %p102 = scmp.eq.s32.totalorder %s14, 0
    %p103 = por %p101, %p102
    %p104 = scmp.ne.s32.totalorder %s90, %s91
    %p105 = scmp.eq.s32.totalorder %s15, 1
    %p106 = por %p104, %p105
    %p108 = scmp.ne.s32.totalorder %s91, %s107
    %p109 = scmp.eq.s32.totalorder %s15, 0
    %p110 = por %p108, %p109
    %p111 = scmp.le.s32.totalorder 1, %s9
    %p112 = scmp.lt.s32.totalorder %s9, 3
    %p113 = pnand %p111, %p112
    %p114 = pneg %p113
    // Predicated region
    $region9: #{shortcut_conv_bn.3} parent=5 // pred_check
      _
    $region10: #{shortcut_conv_bn.3} parent=5 // pred_check_branch
      %116 = sbr.rel (%p113) target = $region12
    $region11: #{shortcut_conv_bn.3} parent=5 // pred_region
      %s117 = ssub.s32 %s9, 1
      // Predicated region
      $region13: #{shortcut_conv_bn.3} parent=11 // pred_check
        %p118 = pneg %p56
      $region14: #{shortcut_conv_bn.3} parent=11 // pred_check_branch
        %120 = sbr.rel (%p118) target = $region16
      $region15: #{shortcut_conv_bn.3} parent=11 // pred_region
        _
      $region16: #{shortcut_conv_bn.3} parent=11 // pred_fallthru
        _
      // Predicated region
      $region17: #{shortcut_conv_bn.3} parent=11 // pred_check
        %p121 = pneg %p77
      $region18: #{shortcut_conv_bn.3} parent=11 // pred_check_branch
        %123 = sbr.rel (%p121) target = $region20
      $region19: #{shortcut_conv_bn.3} parent=11 // pred_region
        _
      $region20: #{shortcut_conv_bn.3} parent=11 // pred_fallthru
        _
    $region12: #{shortcut_conv_bn.3} parent=5 // pred_fallthru
      _
    %p124 = scmp.lt.s32.totalorder %s9, 2
    // Predicated region
    $region21: #{shortcut_conv_bn.3} parent=5 // pred_check
      %p125 = pneg %p124
    $region22: #{shortcut_conv_bn.3} parent=5 // pred_check_branch
      %127 = sbr.rel (%p125) target = $region24
    $region23: #{shortcut_conv_bn.3} parent=5 // pred_region
      // Predicated region
      $region25: #{shortcut_conv_bn.3} parent=23 // pred_check
        %p128 = pneg %p29
      $region26: #{shortcut_conv_bn.3} parent=23 // pred_check_branch
        %130 = sbr.rel (%p128) target = $region28
      $region27: #{shortcut_conv_bn.3} parent=23 // pred_region
        %p131 = scmp.lt.s32.totalorder %s9, 1
        %s132 = scalar_select %p131, %s9, 1
        %s133 = smul.addr %s132, 4
        %s134 = scalar_lea.vmem %s0, %s133
      $region28: #{shortcut_conv_bn.3} parent=23 // pred_fallthru
        _
    $region24: #{shortcut_conv_bn.3} parent=5 // pred_fallthru
      _
    %p135 = scmp.le.s32.totalorder 1, %s9
    %p136 = scmp.lt.s32.totalorder %s9, 3
    %p137 = pnand %p135, %p136
    %p138 = pneg %p137
    // Predicated region
    $region29: #{shortcut_conv_bn.3} parent=5 // pred_check
      _
    $region30: #{shortcut_conv_bn.3} parent=5 // pred_check_branch
      %140 = sbr.rel (%p137) target = $region32
    $region31: #{shortcut_conv_bn.3} parent=5 // pred_region
      %s141 = ssub.s32 %s9, 1
      %p142 = scmp.lt.s32.totalorder %s14, 1
      %s143 = scalar_select %p142, %s14, 1
      %s144 = smul.addr %s143, 4
      %s145 = scalar_lea.vmem %s0, %s144
      %p146 = pneg %p35
      %p147 = pneg %p32
      %p148 = pneg %p56
      %p149 = pneg %p53
      %p150 = pneg %p77
      %p151 = pneg %p74
      %p152 = pneg %p103
      %p153 = pneg %p100
      %p154 = scmp.lt.s32.totalorder %s14, 1
      %s155 = scalar_select %p154, %s14, 1
      %s156 = smul.addr %s155, 8
      %s157 = scalar_lea.vmem %s3, %s156
      %p158 = scmp.lt.s32.totalorder %s14, 1
      %s159 = scalar_select %p158, %s14, 1
      %s160 = smul.addr %s159, 4
      %s161 = scalar_lea.vmem %s0, %s160
      %p162 = scmp.lt.s32.totalorder %s14, 1
      %s163 = scalar_select %p162, %s14, 1
      %s164 = smul.addr %s163, 8
      %s165 = scalar_lea.vmem %s3, %s164
      %v166 = vld [vmem:[%s161] sm:$0xf]
      %v167 = vld [vmem:[%s1] sm:$0xff]
      %v168 = vld [vmem:[%s2] sm:$0xff]
      %170 = vset.pattern.permute.xlu0 0
      %171 = vperm.xlu0 %170, %v168
      %v172 = vpop.permute.xlu0 %171
      %vm174 = vcmask 31744
      %v176 = vsel %vm174, %v167, 0
      %vm178 = vcmask 1043456
      %v180 = vsel %vm178, %v166, 0
      %182 = vmatpush.msra.mxu0 0.0
      %183 = vmatpush.msra.mxu0 0.0
      %184 = vmatpush.msra.mxu0 0.0
      %185 = vmatpush.msra.mxu0 0.0
      %186 = vmatpush.msra.mxu0 0.0
      %187 = vmatpush.msra.mxu0 0.0
      %188 = vmatpush.msra.mxu0 0.0
      %189 = vmatpush.msra.mxu0 0.0
      %190 = vmatpush.msra.mxu0 0.0
      %191 = vmatpush.msra.mxu0 0.0
      %192 = vmatpush.msra.mxu0 0.0
      %193 = vmatpush.msra.mxu0 0.0
      %194 = vmatpush.msra.mxu0 0.0
      %195 = vmatpush.msra.mxu0 0.0
      %196 = vmatpush.msra.mxu0 0.0
      %197 = vmatpush.msra.mxu0 %v180
      %198 = vmatmul.f32.gmra.mxu0 %v176
      %v199 = vpop.f32.mrf.mxu0
      %v200 = vadd.f32 %v172, %v199
      %201 = vdwg.mxu0
      %vm202 = vcmask 523264
      %203 = vst.msk [vmem:[%s165] sm:$0xff] %vm202, %v200
      %p204 = scmp.lt.s32.totalorder %s14, 1
      %s205 = scalar_select %p204, %s14, 1
      %s206 = smul.addr %s205, 8
      %s207 = scalar_lea.vmem %s3, %s206
      // Predicated region
      $region33: #{shortcut_conv_bn.3} parent=31 // pred_check
        %p208 = pneg %p100
      $region34: #{shortcut_conv_bn.3} parent=31 // pred_check_branch
        %210 = sbr.rel (%p208) target = $region36
      $region35: #{shortcut_conv_bn.3} parent=31 // pred_region
        _
      $region36: #{shortcut_conv_bn.3} parent=31 // pred_fallthru
        _
    $region32: #{shortcut_conv_bn.3} parent=5 // pred_fallthru
      _
    %p211 = scmp.le.s32.totalorder 2, %s9
    // Predicated region
    $region37: #{shortcut_conv_bn.3} parent=5 // pred_check
      %p212 = pneg %p211
    $region38: #{shortcut_conv_bn.3} parent=5 // pred_check_branch
      %214 = sbr.rel (%p212) target = $region40
    $region39: #{shortcut_conv_bn.3} parent=5 // pred_region
      %s215 = ssub.s32 %s9, 2
      // Predicated region
      $region41: #{shortcut_conv_bn.3} parent=39 // pred_check
        %p216 = pneg %p106
      $region42: #{shortcut_conv_bn.3} parent=39 // pred_check_branch
        %218 = sbr.rel (%p216) target = $region44
      $region43: #{shortcut_conv_bn.3} parent=39 // pred_region
        %p219 = scmp.lt.s32.totalorder %s15, 1
        %s220 = scalar_select %p219, %s15, 1
        %s221 = smul.addr %s220, 8
        %s222 = scalar_lea.vmem %s3, %s221
      $region44: #{shortcut_conv_bn.3} parent=39 // pred_fallthru
        _
    $region40: #{shortcut_conv_bn.3} parent=5 // pred_fallthru
      _
  $region6: #{shortcut_conv_bn.3} parent=0 // loop_footer
    %s13 = sadd.s32 1, %s9
  $region7: #{shortcut_conv_bn.3} parent=0 // loop_footer_branch
    %8 = sbr.rel target = $region3
  $region8: #{shortcut_conv_bn.3} parent=0 // loop_exit
    _

</llo_original>
